<compile_context>
chip_gen: v6e
topology: v6e:2x2x1
jax: 0.10.0
libtpu: 0.0.40
codegen_flags: <defaults>
</compile_context>

<pallas_src>
import numpy as np
import jax
import jax.numpy as jnp
from jax.experimental import pallas as pl
from jax.experimental.pallas import tpu as pltpu

EMBED = 768          # bert.config.hidden_size
NUM_HEADS = 3        # nodestart / nodeend / edgespan, each Linear(768, 1)
NPAD = 128           # lane-dense packing of the fused head weight (MXU width)
NOUT = 8             # stored output lanes (only 0..2 meaningful)
VOCAB = 64


def _round_up(x, m):
    return ((x + m - 1) // m) * m


def _choose_tm(M, tm_max):
    """Row-tile size: multiple of 16 (bf16 sublane packing), as large as
    possible, but keep >= 4 grid steps on big inputs so the DMA pipeline stays
    full and v7x's two TensorCores both get work."""
    tm = min(tm_max, _round_up(max(M, 1), 16))
    while tm >= 256 and pl.cdiv(M, tm) < 4:
        tm //= 2
    return tm


def _fused_heads_kernel(lhs_ref, w_ref, out_ref):
    """One TM-row tile of tokens per grid step.

    lhs_ref: (TM, 768)   flattened (batch*seq) rows of last_hidden_state (bf16)
    w_ref:   (768, 128)  all three Linear(768, 1) heads packed lane-dense
    out_ref: (TM, 8)     f32 logits block (only lanes 0..2 meaningful)
    """
    acc = jnp.dot(lhs_ref[...], w_ref[...], preferred_element_type=jnp.float32)
    out_ref[...] = acc[:, :NOUT]


def bertlstmcrf_heads_pallas(lhs, head_w, head_b, *, tm_max=512):
    """lhs: (B, L, 768) (bf16 or f32).  head_w: (3, 768) f32.  head_b: (3,) f32.

    Returns logits (B, 3, L) f32, matching the torch cat/transpose layout.
    """
    B, L, D = lhs.shape
    H = head_w.shape[0]
    assert D == EMBED and H == NUM_HEADS

    cdt = lhs.dtype  # compute dtype follows the encoder output (bf16 in prod)

    # Pack the three Linear(768, 1) heads into one lane-dense (768, 128) matrix
    # (zero in lanes H..127) in the compute dtype.
    w_packed = jnp.zeros((D, NPAD), cdt).at[:, :H].set(head_w.T.astype(cdt))

    # Fold batch + sequence into the matmul M dimension. reshape is a free
    # bitcast; no jnp.pad pre-copy — Pallas masks the ragged last block.
    M = B * L
    lhs_2d = lhs.reshape(M, D)

    tm = _choose_tm(M, tm_max)
    grid = (pl.cdiv(M, tm),)

    out = pl.pallas_call(
        _fused_heads_kernel,
        out_shape=jax.ShapeDtypeStruct((M, NOUT), jnp.float32),
        grid=grid,
        in_specs=[
            pl.BlockSpec((tm, D), lambda i: (i, 0)),
            pl.BlockSpec((D, NPAD), lambda i: (0, 0)),
        ],
        out_specs=pl.BlockSpec((tm, NOUT), lambda i: (i, 0)),
        compiler_params=pltpu.CompilerParams(
            dimension_semantics=("parallel",)),
    )(lhs_2d, w_packed)

    # Bias folded in the wrapper (3*B*L scalar adds), then restore the torch
    # (B, 3, L) layout. Layout plumbing only, no compute hoisted out.
    logits = out[:, :H].reshape(B, L, H) + head_b
    return jnp.transpose(logits, (0, 2, 1))


def bertlstmcrf_reference(lhs_f32, head_w_f32, head_b_f32):
    """Pure-JAX reference mirroring the PyTorch forward (post-BERT part)."""
    lg = jnp.einsum('bld,hd->bhl', lhs_f32, head_w_f32,
                    precision=jax.lax.Precision.HIGHEST)
    return lg + head_b_f32[None, :, None]                 # (B, 3, L)


if __name__ == "__main__":
    key = jax.random.PRNGKey(0)
    k_emb, k_w, k_b = jax.random.split(key, 3)

    # ---- token ids (B, S) with zero padding, as the PyTorch module consumes ----
    x_tok = np.zeros((2, 8), dtype=np.int32)
    x_tok[0, :6] = [5, 12, 7, 3, 9, 2]
    x_tok[1, :5] = [4, 8, 15, 6, 11]

    # mask / clip_len logic (plain python on concrete data, like .item() in torch)
    # TODO(synk): .item()-driven dynamic length clipping stays host-side.
    mask = (x_tok != 0).astype(np.int32)
    maxlen = min(x_tok.shape[1], int(mask.sum(1).max()) + 1)
    x_clip = x_tok[:, :maxlen]
    b, l = x_clip.shape                                    # l = 7 here

    # ---- stand-in for the external BERT encoder (emits bf16 natively) ----
    # TODO(synk): the full BERT encoder (self-attention stack) is an external
    # submodule; a deterministic embedding lookup stands in for
    # bert(x, attention_mask=mask).last_hidden_state.
    embed_tbl = (jax.random.normal(k_emb, (VOCAB, EMBED), dtype=jnp.float32)
                 * 0.05).astype(jnp.bfloat16)
    lhs = embed_tbl[jnp.asarray(x_clip)]                   # (B, l, 768) bf16

    # ---- deterministic head parameters (torch Linear(768, 1) layout) ----
    head_w = jax.random.normal(k_w, (NUM_HEADS, EMBED), dtype=jnp.float32) * 0.05
    head_b = jax.random.normal(k_b, (NUM_HEADS,), dtype=jnp.float32) * 0.05

    # TODO(synk): self.dropout + self.lstm and the two CRF modules are dead code
    # on the forward output path (lstm_out discarded, CRFs never invoked), so
    # they are intentionally not computed.

    # ---- run Pallas kernel ----
    logits = bertlstmcrf_heads_pallas(lhs, head_w, head_b)
    logits = jax.block_until_ready(logits)

    # ---- verify against pure-JAX reference (same bf16 input conditioning) ----
    ref = bertlstmcrf_reference(
        lhs.astype(jnp.float32),
        head_w.astype(jnp.bfloat16).astype(jnp.float32),
        head_b)
    assert logits.shape == (b, NUM_HEADS, l)
    np.testing.assert_allclose(np.asarray(logits), np.asarray(ref),
                               rtol=2e-4, atol=2e-4)

    print("KERNEL_OK")
</pallas_src>

<mosaic_0001>
module attributes {stable_mosaic.version = 11 : i64} {
  func.func @_fused_heads_kernel(%arg0: i32, %arg1: memref<16x768xbf16, #tpu.memory_space<vmem>>, %arg2: memref<768x128xbf16, #tpu.memory_space<vmem>>, %arg3: memref<16x8xf32, #tpu.memory_space<vmem>>) attributes {dimension_semantics = [#tpu.dimension_semantics<parallel>], iteration_bounds = array<i64: 1>, scalar_prefetch = 0 : i64, scratch_operands = 0 : i64, tpu.core_type = #tpu.core_type<tc>, window_params = [{transform_indices = @transform_0, window_bounds = array<i64: 16, 768>}, {pipeline_mode = #tpu.pipeline_mode<synchronous>, transform_indices = @transform_1, window_bounds = array<i64: 768, 128>}, {transform_indices = @transform_2, window_bounds = array<i64: 16, 8>}]} {
    %c0 = arith.constant 0 : index
    %c0_0 = arith.constant 0 : index
    %0 = vector.load %arg1[%c0, %c0_0] : memref<16x768xbf16, #tpu.memory_space<vmem>>, vector<16x768xbf16>
    %c0_1 = arith.constant 0 : index
    %c0_2 = arith.constant 0 : index
    %1 = vector.load %arg2[%c0_1, %c0_2] : memref<768x128xbf16, #tpu.memory_space<vmem>>, vector<768x128xbf16>
    %cst = arith.constant dense<0.000000e+00> : vector<16x128xf32>
    %2 = tpu.matmul %0, %1, %cst {dimension_numbers = #tpu.dot_dimension_numbers<[1], [0], [0], [1], [0, 0, 1, 1], [], []>} : vector<16x768xbf16>, vector<768x128xbf16>, vector<16x128xf32> -> vector<16x128xf32>
    %3 = vector.extract_strided_slice %2 {offsets = [0, 0], sizes = [16, 8], strides = [1, 1]} : vector<16x128xf32> to vector<16x8xf32>
    %c0_3 = arith.constant 0 : index
    %c0_4 = arith.constant 0 : index
    %4 = vector.load %arg3[%c0_3, %c0_4] : memref<16x8xf32, #tpu.memory_space<vmem>>, vector<16x8xf32>
    tpu.vector_store %arg3[%c0_3, %c0_4], %3 {strides = array<i32>} : memref<16x8xf32, #tpu.memory_space<vmem>>, vector<16x8xf32>,
    return
  }
  func.func @transform_0(%arg0: i32) -> (i32, i32) {
    %c0_i32 = arith.constant 0 : i32
    %c0_i32_0 = arith.constant 0 : i32
    return %arg0, %c0_i32 : i32, i32
  }
  func.func @transform_1(%arg0: i32) -> (i32, i32) {
    %c0_i32 = arith.constant 0 : i32
    %c0_i32_0 = arith.constant 0 : i32
    %c0_i32_1 = arith.constant 0 : i32
    return %c0_i32, %c0_i32_0 : i32, i32
  }
  func.func @transform_2(%arg0: i32) -> (i32, i32) {
    %c0_i32 = arith.constant 0 : i32
    %c0_i32_0 = arith.constant 0 : i32
    return %arg0, %c0_i32 : i32, i32
  }
}

</mosaic_0001>

<llo_original>
// kernel: tpu_custom_call.1
$region0: #{tpu_custom_call.1}
  #allocation0 [shape = 'u32[]', space=smem, size = 0x4, offset = 0x4, fixed_abs, tag = 'smem constant byte address 0x4 - core index']
  #allocation1 [shape = 'u32[144,128]{1,0:T(1,128)}', space=vmem, size = 0x12000, scoped, tag = 'internal scratch']
  %s0 = inlined_call_operand.hbm [shape: bf16[14,768], index: 0, kind: input, shape index: {}]
  %s1 = inlined_call_operand.hbm [shape: bf16[768,128], index: 1, kind: input, shape index: {}]
  %s2 = inlined_call_operand.vmem [shape: f32[14,8], index: 2, kind: output, shape index: {}]
  %s3 = sld [smem:[#allocation0]]
  $region26: #{tpu_custom_call.1} parent=0
    _
  %s5 = ssub.s32 1, %s3
  %s6 = scalar_select 0, %s5, %s3
  $region1: #{tpu_custom_call.1} parent=0
    #allocation2 [shape = 'u8[24576]{0}', space=vmem, size = 0x6000, scoped, tag = 'input window, operand 0, single buffered']
    #allocation3 [shape = 's32[1]{0}', space=sflag, size = 0x4, scoped, tag = 'scoped memory for tpu_custom_call.1']
    #allocation4 [shape = 'u8[196608]{0}', space=vmem, size = 0x30000, scoped, tag = 'input window, operand 1, single buffered']
    #allocation5 [shape = 's32[1]{0}', space=sflag, size = 0x4, scoped, tag = 'scoped memory for tpu_custom_call.1']
    %7 = vsyncpa [#allocation3], 0
    %8 = vsyncpa [#allocation5], 0
    // Predicated region
    $region2: #{tpu_custom_call.1} parent=1 // pred_check
      _
    $region3: #{tpu_custom_call.1} parent=1 // pred_check_branch
      %10 = sbr.rel (0) target = $region5
    $region4: #{tpu_custom_call.1} parent=1 // pred_region
      %s12 = ssub.s32 768, 768
      %13 = vsyncadd [#allocation3], %s12
      %s14 = sshll.u32 [#allocation2], 4
      %s15 = int_to_ptr.vmem [resolvable:$true] %s14
      %20 = dma.hbm_to_vmem [thread:$0]  %s0, 768, %s15, [#allocation3], 384, 384, 24
    $region5: #{tpu_custom_call.1} parent=1 // pred_fallthru
      _
    // Predicated region
    $region6: #{tpu_custom_call.1} parent=1 // pred_check
      _
    $region7: #{tpu_custom_call.1} parent=1 // pred_check_branch
      %22 = sbr.rel (0) target = $region9
    $region8: #{tpu_custom_call.1} parent=1 // pred_region
      %s24 = ssub.s32 6144, 6144
      %25 = vsyncadd [#allocation5], %s24
      %s26 = sshll.u32 [#allocation4], 4
      %s27 = int_to_ptr.vmem [resolvable:$true] %s26
      %32 = dma.hbm_to_vmem [thread:$0]  %s1, 6144, %s27, [#allocation5], 64, 64, 4
    $region9: #{tpu_custom_call.1} parent=1 // pred_fallthru
      _
    // Predicated region
    $region10: #{tpu_custom_call.1} parent=1 // pred_check
      _
    $region11: #{tpu_custom_call.1} parent=1 // pred_check_branch
      %34 = sbr.rel (0) target = $region13
    $region12: #{tpu_custom_call.1} parent=1 // pred_region
      %35 = dma.done [#allocation3], 768
    $region13: #{tpu_custom_call.1} parent=1 // pred_fallthru
      _
    // Predicated region
    $region14: #{tpu_custom_call.1} parent=1 // pred_check
      _
    $region15: #{tpu_custom_call.1} parent=1 // pred_check_branch
      %37 = sbr.rel (0) target = $region17
    $region16: #{tpu_custom_call.1} parent=1 // pred_region
      %38 = dma.done [#allocation5], 6144
    $region17: #{tpu_custom_call.1} parent=1 // pred_fallthru
      _
    %v40 = vld [vmem:[#allocation2] sm:$0xff]
    %v41 = vld [vmem:[#allocation2 + $0x8] sm:$0xff]
    %v42 = vld [vmem:[#allocation2 + $0x10] sm:$0xff]
    %v43 = vld [vmem:[#allocation2 + $0x18] sm:$0xff]
    %v44 = vld [vmem:[#allocation2 + $0x20] sm:$0xff]
    %v45 = vld [vmem:[#allocation2 + $0x28] sm:$0xff]
    %v46 = vld [vmem:[#allocation4] sm:$0xf]
    %v47 = vld [vmem:[#allocation4 + $0x4] sm:$0xf]
    %v48 = vld [vmem:[#allocation4 + $0x8] sm:$0xf]
    %v49 = vld [vmem:[#allocation4 + $0xc] sm:$0xf]
    %v50 = vld [vmem:[#allocation4 + $0x10] sm:$0xf]
    %v51 = vld [vmem:[#allocation4 + $0x14] sm:$0xf]
    %v52 = vld [vmem:[#allocation4 + $0x18] sm:$0xf]
    %v53 = vld [vmem:[#allocation4 + $0x1c] sm:$0xf]
    %v54 = vld [vmem:[#allocation4 + $0x20] sm:$0xf]
    %v55 = vld [vmem:[#allocation4 + $0x24] sm:$0xf]
    %v56 = vld [vmem:[#allocation4 + $0x28] sm:$0xf]
    %v57 = vld [vmem:[#allocation4 + $0x2c] sm:$0xf]
    %v58 = vld [vmem:[#allocation4 + $0x30] sm:$0xf]
    %v59 = vld [vmem:[#allocation4 + $0x34] sm:$0xf]
    %v60 = vld [vmem:[#allocation4 + $0x38] sm:$0xf]
    %v61 = vld [vmem:[#allocation4 + $0x3c] sm:$0xf]
    %v62 = vld [vmem:[#allocation4 + $0x40] sm:$0xf]
    %v63 = vld [vmem:[#allocation4 + $0x44] sm:$0xf]
    %v64 = vld [vmem:[#allocation4 + $0x48] sm:$0xf]
    %v65 = vld [vmem:[#allocation4 + $0x4c] sm:$0xf]
    %v66 = vld [vmem:[#allocation4 + $0x50] sm:$0xf]
    %v67 = vld [vmem:[#allocation4 + $0x54] sm:$0xf]
    %v68 = vld [vmem:[#allocation4 + $0x58] sm:$0xf]
    %v69 = vld [vmem:[#allocation4 + $0x5c] sm:$0xf]
    %v70 = vld [vmem:[#allocation4 + $0x60] sm:$0xf]
    %v71 = vld [vmem:[#allocation4 + $0x64] sm:$0xf]
    %v72 = vld [vmem:[#allocation4 + $0x68] sm:$0xf]
    %v73 = vld [vmem:[#allocation4 + $0x6c] sm:$0xf]
    %v74 = vld [vmem:[#allocation4 + $0x70] sm:$0xf]
    %v75 = vld [vmem:[#allocation4 + $0x74] sm:$0xf]
    %v76 = vld [vmem:[#allocation4 + $0x78] sm:$0xf]
    %v77 = vld [vmem:[#allocation4 + $0x7c] sm:$0xf]
    %v78 = vld [vmem:[#allocation4 + $0x80] sm:$0xf]
    %v79 = vld [vmem:[#allocation4 + $0x84] sm:$0xf]
    %v80 = vld [vmem:[#allocation4 + $0x88] sm:$0xf]
    %v81 = vld [vmem:[#allocation4 + $0x8c] sm:$0xf]
    %v82 = vld [vmem:[#allocation4 + $0x90] sm:$0xf]
    %v83 = vld [vmem:[#allocation4 + $0x94] sm:$0xf]
    %v84 = vld [vmem:[#allocation4 + $0x98] sm:$0xf]
    %v85 = vld [vmem:[#allocation4 + $0x9c] sm:$0xf]
    %v86 = vld [vmem:[#allocation4 + $0xa0] sm:$0xf]
    %v87 = vld [vmem:[#allocation4 + $0xa4] sm:$0xf]
    %v88 = vld [vmem:[#allocation4 + $0xa8] sm:$0xf]
    %v89 = vld [vmem:[#allocation4 + $0xac] sm:$0xf]
    %v90 = vld [vmem:[#allocation4 + $0xb0] sm:$0xf]
    %v91 = vld [vmem:[#allocation4 + $0xb4] sm:$0xf]
    %v92 = vld [vmem:[#allocation4 + $0xb8] sm:$0xf]
    %v93 = vld [vmem:[#allocation4 + $0xbc] sm:$0xf]
    %v94 = vld [vmem:[#allocation4 + $0xc0] sm:$0xf]
    %v95 = vld [vmem:[#allocation4 + $0xc4] sm:$0xf]
    %v96 = vld [vmem:[#allocation4 + $0xc8] sm:$0xf]
    %v97 = vld [vmem:[#allocation4 + $0xcc] sm:$0xf]
    %v98 = vld [vmem:[#allocation4 + $0xd0] sm:$0xf]
    %v99 = vld [vmem:[#allocation4 + $0xd4] sm:$0xf]
    %v100 = vld [vmem:[#allocation4 + $0xd8] sm:$0xf]
    %v101 = vld [vmem:[#allocation4 + $0xdc] sm:$0xf]
    %v102 = vld [vmem:[#allocation4 + $0xe0] sm:$0xf]
    %v103 = vld [vmem:[#allocation4 + $0xe4] sm:$0xf]
    %v104 = vld [vmem:[#allocation4 + $0xe8] sm:$0xf]
    %v105 = vld [vmem:[#allocation4 + $0xec] sm:$0xf]
    %v106 = vld [vmem:[#allocation4 + $0xf0] sm:$0xf]
    %v107 = vld [vmem:[#allocation4 + $0xf4] sm:$0xf]
    %v108 = vld [vmem:[#allocation4 + $0xf8] sm:$0xf]
    %v109 = vld [vmem:[#allocation4 + $0xfc] sm:$0xf]
    %v110 = vld [vmem:[#allocation4 + $0x100] sm:$0xf]
    %v111 = vld [vmem:[#allocation4 + $0x104] sm:$0xf]
    %v112 = vld [vmem:[#allocation4 + $0x108] sm:$0xf]
    %v113 = vld [vmem:[#allocation4 + $0x10c] sm:$0xf]
    %v114 = vld [vmem:[#allocation4 + $0x110] sm:$0xf]
    %v115 = vld [vmem:[#allocation4 + $0x114] sm:$0xf]
    %v116 = vld [vmem:[#allocation4 + $0x118] sm:$0xf]
    %v117 = vld [vmem:[#allocation4 + $0x11c] sm:$0xf]
    %v118 = vld [vmem:[#allocation4 + $0x120] sm:$0xf]
    %v119 = vld [vmem:[#allocation4 + $0x124] sm:$0xf]
    %v120 = vld [vmem:[#allocation4 + $0x128] sm:$0xf]
    %v121 = vld [vmem:[#allocation4 + $0x12c] sm:$0xf]
    %v122 = vld [vmem:[#allocation4 + $0x130] sm:$0xf]
    %v123 = vld [vmem:[#allocation4 + $0x134] sm:$0xf]
    %v124 = vld [vmem:[#allocation4 + $0x138] sm:$0xf]
    %v125 = vld [vmem:[#allocation4 + $0x13c] sm:$0xf]
    %v126 = vld [vmem:[#allocation4 + $0x140] sm:$0xf]
    %v127 = vld [vmem:[#allocation4 + $0x144] sm:$0xf]
    %v128 = vld [vmem:[#allocation4 + $0x148] sm:$0xf]
    %v129 = vld [vmem:[#allocation4 + $0x14c] sm:$0xf]
    %v130 = vld [vmem:[#allocation4 + $0x150] sm:$0xf]
    %v131 = vld [vmem:[#allocation4 + $0x154] sm:$0xf]
    %v132 = vld [vmem:[#allocation4 + $0x158] sm:$0xf]
    %v133 = vld [vmem:[#allocation4 + $0x15c] sm:$0xf]
    %v134 = vld [vmem:[#allocation4 + $0x160] sm:$0xf]
    %v135 = vld [vmem:[#allocation4 + $0x164] sm:$0xf]
    %v136 = vld [vmem:[#allocation4 + $0x168] sm:$0xf]
    %v137 = vld [vmem:[#allocation4 + $0x16c] sm:$0xf]
    %v138 = vld [vmem:[#allocation4 + $0x170] sm:$0xf]
    %v139 = vld [vmem:[#allocation4 + $0x174] sm:$0xf]
    %v140 = vld [vmem:[#allocation4 + $0x178] sm:$0xf]
    %v141 = vld [vmem:[#allocation4 + $0x17c] sm:$0xf]
    %v148 = vunpack.c.l.b16 %v40
    %v149 = vunpack.c.h.b16 %v40
    %v150 = vunpack.c.l.b16 %v41
    %v151 = vunpack.c.h.b16 %v41
    %v152 = vunpack.c.l.b16 %v42
    %v153 = vunpack.c.h.b16 %v42
    %v154 = vunpack.c.l.b16 %v43
    %v155 = vunpack.c.h.b16 %v43
    %v156 = vunpack.c.l.b16 %v44
    %v157 = vunpack.c.h.b16 %v44
    %v158 = vunpack.c.l.b16 %v45
    %v159 = vunpack.c.h.b16 %v45
    %v160 = vpack.c.b16 %v154, %v148
    %v161 = vpack.c.b16 %v155, %v149
    %v162 = vpack.c.b16 %v156, %v150
    %v163 = vpack.c.b16 %v157, %v151
    %v164 = vpack.c.b16 %v158, %v152
    %v165 = vpack.c.b16 %v159, %v153
    %v268 = vunpack.c.l.b16 %v46
    %v269 = vunpack.c.l.b16 %v47
    %v270 = vunpack.c.l.b16 %v48
    %v271 = vunpack.c.l.b16 %v49
    %v272 = vunpack.c.l.b16 %v50
    %v273 = vunpack.c.l.b16 %v51
    %v274 = vunpack.c.l.b16 %v52
    %v275 = vunpack.c.l.b16 %v53
    %v276 = vunpack.c.l.b16 %v54
    %v277 = vunpack.c.l.b16 %v55
    %v278 = vunpack.c.l.b16 %v56
    %v279 = vunpack.c.l.b16 %v57
    %v280 = vunpack.c.l.b16 %v58
    %v281 = vunpack.c.l.b16 %v59
    %v282 = vunpack.c.l.b16 %v60
    %v283 = vunpack.c.l.b16 %v61
    %v284 = vunpack.c.l.b16 %v62
    %v285 = vunpack.c.l.b16 %v63
    %v286 = vunpack.c.l.b16 %v64
    %v287 = vunpack.c.l.b16 %v65
    %v288 = vunpack.c.l.b16 %v66
    %v289 = vunpack.c.l.b16 %v67
    %v290 = vunpack.c.l.b16 %v68
    %v291 = vunpack.c.l.b16 %v69
    %v292 = vunpack.c.l.b16 %v70
    %v293 = vunpack.c.l.b16 %v71
    %v294 = vunpack.c.l.b16 %v72
    %v295 = vunpack.c.l.b16 %v73
    %v296 = vunpack.c.l.b16 %v74
    %v297 = vunpack.c.l.b16 %v75
    %v298 = vunpack.c.l.b16 %v76
    %v299 = vunpack.c.l.b16 %v77
    %v300 = vunpack.c.l.b16 %v78
    %v301 = vunpack.c.l.b16 %v79
    %v302 = vunpack.c.l.b16 %v80
    %v303 = vunpack.c.l.b16 %v81
    %v304 = vunpack.c.l.b16 %v82
    %v305 = vunpack.c.l.b16 %v83
    %v306 = vunpack.c.l.b16 %v84
    %v307 = vunpack.c.l.b16 %v85
    %v308 = vunpack.c.l.b16 %v86
    %v309 = vunpack.c.l.b16 %v87
    %v310 = vunpack.c.l.b16 %v88
    %v311 = vunpack.c.l.b16 %v89
    %v312 = vunpack.c.l.b16 %v90
    %v313 = vunpack.c.l.b16 %v91
    %v314 = vunpack.c.l.b16 %v92
    %v315 = vunpack.c.l.b16 %v93
    %v316 = vunpack.c.l.b16 %v94
    %v317 = vunpack.c.l.b16 %v95
    %v318 = vunpack.c.l.b16 %v96
    %v319 = vunpack.c.l.b16 %v97
    %v320 = vunpack.c.l.b16 %v98
    %v321 = vunpack.c.l.b16 %v99
    %v322 = vunpack.c.l.b16 %v100
    %v323 = vunpack.c.l.b16 %v101
    %v324 = vunpack.c.l.b16 %v102
    %v325 = vunpack.c.l.b16 %v103
    %v326 = vunpack.c.l.b16 %v104
    %v327 = vunpack.c.l.b16 %v105
    %v328 = vunpack.c.l.b16 %v106
    %v329 = vunpack.c.l.b16 %v107
    %v330 = vunpack.c.l.b16 %v108
    %v331 = vunpack.c.l.b16 %v109
    %v332 = vunpack.c.l.b16 %v110
    %v333 = vunpack.c.l.b16 %v111
    %v334 = vunpack.c.l.b16 %v112
    %v335 = vunpack.c.l.b16 %v113
    %v336 = vunpack.c.l.b16 %v114
    %v337 = vunpack.c.l.b16 %v115
    %v338 = vunpack.c.l.b16 %v116
    %v339 = vunpack.c.l.b16 %v117
    %v340 = vunpack.c.l.b16 %v118
    %v341 = vunpack.c.l.b16 %v119
    %v342 = vunpack.c.l.b16 %v120
    %v343 = vunpack.c.l.b16 %v121
    %v344 = vunpack.c.l.b16 %v122
    %v345 = vunpack.c.l.b16 %v123
    %v346 = vunpack.c.l.b16 %v124
    %v347 = vunpack.c.l.b16 %v125
    %v348 = vunpack.c.l.b16 %v126
    %v349 = vunpack.c.l.b16 %v127
    %v350 = vunpack.c.l.b16 %v128
    %v351 = vunpack.c.l.b16 %v129
    %v352 = vunpack.c.l.b16 %v130
    %v353 = vunpack.c.l.b16 %v131
    %v354 = vunpack.c.l.b16 %v132
    %v355 = vunpack.c.l.b16 %v133
    %v356 = vunpack.c.l.b16 %v134
    %v357 = vunpack.c.l.b16 %v135
    %v358 = vunpack.c.l.b16 %v136
    %v359 = vunpack.c.l.b16 %v137
    %v360 = vunpack.c.l.b16 %v138
    %v361 = vunpack.c.l.b16 %v139
    %v362 = vunpack.c.l.b16 %v140
    %v363 = vunpack.c.l.b16 %v141
    %v364 = vpack.c.b16 %v269, %v268
    %v365 = vpack.c.b16 %v271, %v270
    %v366 = vpack.c.b16 %v273, %v272
    %v367 = vpack.c.b16 %v275, %v274
    %v368 = vpack.c.b16 %v277, %v276
    %v369 = vpack.c.b16 %v279, %v278
    %v370 = vpack.c.b16 %v281, %v280
    %v371 = vpack.c.b16 %v283, %v282
    %v372 = vpack.c.b16 %v285, %v284
    %v373 = vpack.c.b16 %v287, %v286
    %v374 = vpack.c.b16 %v289, %v288
    %v375 = vpack.c.b16 %v291, %v290
    %v376 = vpack.c.b16 %v293, %v292
    %v377 = vpack.c.b16 %v295, %v294
    %v378 = vpack.c.b16 %v297, %v296
    %v379 = vpack.c.b16 %v299, %v298
    %v380 = vpack.c.b16 %v301, %v300
    %v381 = vpack.c.b16 %v303, %v302
    %v382 = vpack.c.b16 %v305, %v304
    %v383 = vpack.c.b16 %v307, %v306
    %v384 = vpack.c.b16 %v309, %v308
    %v385 = vpack.c.b16 %v311, %v310
    %v386 = vpack.c.b16 %v313, %v312
    %v387 = vpack.c.b16 %v315, %v314
    %v388 = vpack.c.b16 %v317, %v316
    %v389 = vpack.c.b16 %v319, %v318
    %v390 = vpack.c.b16 %v321, %v320
    %v391 = vpack.c.b16 %v323, %v322
    %v392 = vpack.c.b16 %v325, %v324
    %v393 = vpack.c.b16 %v327, %v326
    %v394 = vpack.c.b16 %v329, %v328
    %v395 = vpack.c.b16 %v331, %v330
    %v396 = vpack.c.b16 %v333, %v332
    %v397 = vpack.c.b16 %v335, %v334
    %v398 = vpack.c.b16 %v337, %v336
    %v399 = vpack.c.b16 %v339, %v338
    %v400 = vpack.c.b16 %v341, %v340
    %v401 = vpack.c.b16 %v343, %v342
    %v402 = vpack.c.b16 %v345, %v344
    %v403 = vpack.c.b16 %v347, %v346
    %v404 = vpack.c.b16 %v349, %v348
    %v405 = vpack.c.b16 %v351, %v350
    %v406 = vpack.c.b16 %v353, %v352
    %v407 = vpack.c.b16 %v355, %v354
    %v408 = vpack.c.b16 %v357, %v356
    %v409 = vpack.c.b16 %v359, %v358
    %v410 = vpack.c.b16 %v361, %v360
    %v411 = vpack.c.b16 %v363, %v362
    %460 = vmatprep.subr.bf16.mxu0 0
    %461 = vmatpush1.bf16.msra.mxu0 %v371
    %462 = vmatprep.subr.bf16.mxu0 0
    %463 = vmatpush1.bf16.msra.mxu0 %v370
    %464 = vmatprep.subr.bf16.mxu0 0
    %465 = vmatpush1.bf16.msra.mxu0 %v369
    %466 = vmatprep.subr.bf16.mxu0 0
    %467 = vmatpush1.bf16.msra.mxu0 %v368
    %468 = vmatprep.subr.bf16.mxu0 0
    %469 = vmatpush1.bf16.msra.mxu0 %v367
    %470 = vmatprep.subr.bf16.mxu0 0
    %471 = vmatpush1.bf16.msra.mxu0 %v366
    %472 = vmatprep.subr.bf16.mxu0 0
    %473 = vmatpush1.bf16.msra.mxu0 %v365
    %474 = vmatprep.subr.bf16.mxu0 0
    %475 = vmatpush1.bf16.msra.mxu0 %v364
    %476 = vmatprep.subr.bf16.mxu0 0
    %477 = vmatpush2.bf16.msra.mxu0 %v379
    %478 = vmatprep.subr.bf16.mxu0 0
    %479 = vmatpush2.bf16.msra.mxu0 %v378
    %480 = vmatprep.subr.bf16.mxu0 0
    %481 = vmatpush2.bf16.msra.mxu0 %v377
    %482 = vmatprep.subr.bf16.mxu0 0
    %483 = vmatpush2.bf16.msra.mxu0 %v376
    %484 = vmatprep.subr.bf16.mxu0 0
    %485 = vmatpush2.bf16.msra.mxu0 %v375
    %486 = vmatprep.subr.bf16.mxu0 0
    %487 = vmatpush2.bf16.msra.mxu0 %v374
    %488 = vmatprep.subr.bf16.mxu0 0
    %489 = vmatpush2.bf16.msra.mxu0 %v373
    %490 = vmatprep.subr.bf16.mxu0 0
    %491 = vmatpush2.bf16.msra.mxu0 %v372
    %492 = vmatprep.mubr.bf16.mxu0 %v161
    %493 = vmatmul.mubr.bf16.gmra.mxu0 %v160
    %v494 = vpop.f32.mrf.mxu0
    %v495 = vadd.f32 0.0, %v494
    %v496 = vpop.f32.mrf.mxu0
    %v497 = vpop.f32.mrf.mxu0
    %v498 = vadd.f32 0.0, %v497
    %v499 = vpop.f32.mrf.mxu0
    %500 = vdwg.mxu0
    %501 = vmatprep.subr.bf16.mxu0 0
    %502 = vmatpush1.bf16.msra.mxu0 %v387
    %503 = vmatprep.subr.bf16.mxu0 0
    %504 = vmatpush1.bf16.msra.mxu0 %v386
    %505 = vmatprep.subr.bf16.mxu0 0
    %506 = vmatpush1.bf16.msra.mxu0 %v385
    %507 = vmatprep.subr.bf16.mxu0 0
    %508 = vmatpush1.bf16.msra.mxu0 %v384
    %509 = vmatprep.subr.bf16.mxu0 0
    %510 = vmatpush1.bf16.msra.mxu0 %v383
    %511 = vmatprep.subr.bf16.mxu0 0
    %512 = vmatpush1.bf16.msra.mxu0 %v382
    %513 = vmatprep.subr.bf16.mxu0 0
    %514 = vmatpush1.bf16.msra.mxu0 %v381
    %515 = vmatprep.subr.bf16.mxu0 0
    %516 = vmatpush1.bf16.msra.mxu0 %v380
    %517 = vmatprep.subr.bf16.mxu0 0
    %518 = vmatpush2.bf16.msra.mxu0 %v395
    %519 = vmatprep.subr.bf16.mxu0 0
    %520 = vmatpush2.bf16.msra.mxu0 %v394
    %521 = vmatprep.subr.bf16.mxu0 0
    %522 = vmatpush2.bf16.msra.mxu0 %v393
    %523 = vmatprep.subr.bf16.mxu0 0
    %524 = vmatpush2.bf16.msra.mxu0 %v392
    %525 = vmatprep.subr.bf16.mxu0 0
    %526 = vmatpush2.bf16.msra.mxu0 %v391
    %527 = vmatprep.subr.bf16.mxu0 0
    %528 = vmatpush2.bf16.msra.mxu0 %v390
    %529 = vmatprep.subr.bf16.mxu0 0
    %530 = vmatpush2.bf16.msra.mxu0 %v389
    %531 = vmatprep.subr.bf16.mxu0 0
    %532 = vmatpush2.bf16.msra.mxu0 %v388
    %533 = vmatprep.mubr.bf16.mxu0 %v163
    %534 = vmatmul.mubr.bf16.gmra.mxu0 %v162
    %v535 = vpop.f32.mrf.mxu0
    %v536 = vadd.f32 %v495, %v535
    %v537 = vpop.f32.mrf.mxu0
    %v538 = vpop.f32.mrf.mxu0
    %v539 = vadd.f32 %v498, %v538
    %v540 = vpop.f32.mrf.mxu0
    %541 = vdwg.mxu0
    %542 = vmatprep.subr.bf16.mxu0 0
    %543 = vmatpush1.bf16.msra.mxu0 %v403
    %544 = vmatprep.subr.bf16.mxu0 0
    %545 = vmatpush1.bf16.msra.mxu0 %v402
    %546 = vmatprep.subr.bf16.mxu0 0
    %547 = vmatpush1.bf16.msra.mxu0 %v401
    %548 = vmatprep.subr.bf16.mxu0 0
    %549 = vmatpush1.bf16.msra.mxu0 %v400
    %550 = vmatprep.subr.bf16.mxu0 0
    %551 = vmatpush1.bf16.msra.mxu0 %v399
    %552 = vmatprep.subr.bf16.mxu0 0
    %553 = vmatpush1.bf16.msra.mxu0 %v398
    %554 = vmatprep.subr.bf16.mxu0 0
    %555 = vmatpush1.bf16.msra.mxu0 %v397
    %556 = vmatprep.subr.bf16.mxu0 0
    %557 = vmatpush1.bf16.msra.mxu0 %v396
    %558 = vmatprep.subr.bf16.mxu0 0
    %559 = vmatpush2.bf16.msra.mxu0 %v411
    %560 = vmatprep.subr.bf16.mxu0 0
    %561 = vmatpush2.bf16.msra.mxu0 %v410
    %562 = vmatprep.subr.bf16.mxu0 0
    %563 = vmatpush2.bf16.msra.mxu0 %v409
    %564 = vmatprep.subr.bf16.mxu0 0
    %565 = vmatpush2.bf16.msra.mxu0 %v408
    %566 = vmatprep.subr.bf16.mxu0 0
    %567 = vmatpush2.bf16.msra.mxu0 %v407
    %568 = vmatprep.subr.bf16.mxu0 0
    %569 = vmatpush2.bf16.msra.mxu0 %v406
    %570 = vmatprep.subr.bf16.mxu0 0
    %571 = vmatpush2.bf16.msra.mxu0 %v405
    %572 = vmatprep.subr.bf16.mxu0 0
    %573 = vmatpush2.bf16.msra.mxu0 %v404
    %574 = vmatprep.mubr.bf16.mxu0 %v165
    %575 = vmatmul.mubr.bf16.gmra.mxu0 %v164
    %v576 = vpop.f32.mrf.mxu0
    %v577 = vadd.f32 %v536, %v576
    %v578 = vpop.f32.mrf.mxu0
    %v579 = vpop.f32.mrf.mxu0
    %v580 = vadd.f32 %v539, %v579
    %v581 = vpop.f32.mrf.mxu0
    %582 = vdwg.mxu0
    %vm583 = vcmask 64512
    %584 = vst.msk [vmem:[%s2] sm:$0xff] %vm583, %v577
    %585 = vst.msk [vmem:[%s2 + $0x8] sm:$0xff] %vm583, %v580
    // Predicated region
    $region18: #{tpu_custom_call.1} parent=1 // pred_check
      _
    $region19: #{tpu_custom_call.1} parent=1 // pred_check_branch
      %587 = sbr.rel (0) target = $region21
    $region20: #{tpu_custom_call.1} parent=1 // pred_region
      _
    $region21: #{tpu_custom_call.1} parent=1 // pred_fallthru
      _
    // Predicated region
    $region22: #{tpu_custom_call.1} parent=1 // pred_check
      _
    $region23: #{tpu_custom_call.1} parent=1 // pred_check_branch
      %589 = sbr.rel (0) target = $region25
    $region24: #{tpu_custom_call.1} parent=1 // pred_region
      _
    $region25: #{tpu_custom_call.1} parent=1 // pred_fallthru
      _
    %590 = vsyncpa [#allocation3], 1
    %591 = vsyncpa [#allocation5], 1

</llo_original>
